<compile_context>
chip_gen: v7x
topology: tpu7x:2x2x1
jax: 0.10.0
libtpu: 0.0.40
codegen_flags: <defaults>
</compile_context>

<pallas_src>
import jax
import jax.numpy as jnp
from jax import lax
from jax.experimental import pallas as pl
from jax.experimental.pallas import tpu as pltpu


def _spectral_norm(w, key, n_power_iterations=1):
    """SpectralNorm (SAGAN-style): normalize weight by its top singular value,
    estimated with power iteration from a deterministic u vector. Plain-JAX glue."""
    out_dim = w.shape[0]
    w_mat = w.reshape(out_dim, -1)
    u = jax.random.normal(key, (out_dim,), dtype=w.dtype)
    u = u / (jnp.linalg.norm(u) + 1e-12)
    for _ in range(n_power_iterations):
        v = w_mat.T @ u
        v = v / (jnp.linalg.norm(v) + 1e-12)
        u = w_mat @ v
        u = u / (jnp.linalg.norm(u) + 1e-12)
    sigma = u @ (w_mat @ v)
    return w / sigma


def _self_attn_kernel(x_ref, xcol_ref, w_ref, b_ref, out_ref):
    # x_ref:    (1, C, HW)  full spatial extent (rows of att -> f)
    # xcol_ref: (1, C, TJ)  column tile of x    (cols of att -> g)
    # w_ref:    (2A, C)     stacked [wf; wg]
    # b_ref:    (2A, 1)     stacked [bf; bg]
    # out_ref:  (1, HW, TJ) column tile of the attention map
    A = w_ref.shape[0] // 2

    x = x_ref[0]            # (C, HW)
    xj = xcol_ref[0]        # (C, TJ)
    w = w_ref[...]          # (2A, C)
    b = b_ref[...]          # (2A, 1)

    # 1x1 convolutions == channel matmuls (tiny; MXU is never the bottleneck).
    f = jnp.dot(w[:A], x, preferred_element_type=jnp.float32) + b[:A]    # (A, HW)
    g = jnp.dot(w[A:], xj, preferred_element_type=jnp.float32) + b[A:]   # (A, TJ)

    # att[i, j] = sum_a f[a, i] * g[a, j]: contract the leading A axis of both
    # operands so the transpose is fused into the matmul (no explicit f.T).
    att = lax.dot_general(
        f, g,
        dimension_numbers=(((0,), (0,)), ((), ())),
        preferred_element_type=jnp.float32,
    )                                                                    # (HW, TJ)

    # softmax over dim=1 of (N, HW, HW) -> axis 0 here (over rows). Each column
    # is normalized independently, so column tiling needs no online softmax.
    m = jnp.max(att, axis=0, keepdims=True)          # (1, TJ)
    e = jnp.exp(att - m)                             # (HW, TJ)  -- EUP-bound
    s = jnp.sum(e, axis=0, keepdims=True)            # (1, TJ)
    inv = pl.reciprocal(s, approx=True)              # EUP-cheap vs. a full divide
    out_ref[0] = e * inv


def self_attention(x, wf, bf, wg, bg):
    """x: (N, C, H, W) float32. Returns (N, H*W, H*W) float32 (softmax over axis 1)."""
    N, C, H, W = x.shape
    A = wf.shape[0]
    HW = H * W
    x_flat = x.reshape(N, C, HW)

    # Fuse the two 1x1-conv projections into single stacked operands.
    w_fg = jnp.concatenate([wf, wg], axis=0)                      # (2A, C)
    b_fg = jnp.concatenate([bf, bg], axis=0).reshape(2 * A, 1)    # (2A, 1)

    # Column tile width of the (HW, HW) attention map: multiple of 128 for a
    # lane-dense output store; bounds VMEM to ~4*HW*TJ per output buffer (well
    # under v7x's 64 MiB even at large HW).
    if HW % 512 == 0:
        TJ = 512
    elif HW % 128 == 0:
        TJ = 128
    else:
        TJ = HW  # full-width block (equals array extent) for odd spatial sizes
    n_col = HW // TJ

    cost = pl.CostEstimate(
        flops=int(N * (2 * HW * HW * A + 2 * (2 * A) * C * HW)),
        transcendentals=int(N * HW * HW),
        bytes_accessed=int(N * (4 * C * HW * (n_col + 1) + 4 * HW * HW)
                           + 4 * 2 * A * (C + 1)),
    )

    return pl.pallas_call(
        _self_attn_kernel,
        out_shape=jax.ShapeDtypeStruct((N, HW, HW), jnp.float32),
        grid_spec=pltpu.PrefetchScalarGridSpec(
            num_scalar_prefetch=0,
            grid=(N, n_col),
            in_specs=[
                pl.BlockSpec((1, C, HW), lambda b, j: (b, 0, 0)),   # full x -> f
                pl.BlockSpec((1, C, TJ), lambda b, j: (b, 0, j)),   # x col tile -> g
                pl.BlockSpec((2 * A, C), lambda b, j: (0, 0)),
                pl.BlockSpec((2 * A, 1), lambda b, j: (0, 0)),
            ],
            out_specs=pl.BlockSpec((1, HW, TJ), lambda b, j: (b, 0, j)),
        ),
        compiler_params=pltpu.CompilerParams(
            # Both axes truly parallel (output block differs per (b, j)):
            # shards across v7x's 2 TensorCores, no-op on v5e/v6e.
            dimension_semantics=("parallel", "parallel"),
        ),
        cost_estimate=cost,
    )(x_flat, x_flat, w_fg, b_fg)


def _reference(x, wf, bf, wg, bg):
    N, C, H, W = x.shape
    A = wf.shape[0]
    HW = H * W
    xf = x.reshape(N, C, HW)
    f = jnp.einsum("ac,ncp->nap", wf, xf) + bf.reshape(1, A, 1)   # (N, A, HW)
    g = jnp.einsum("ac,ncp->nap", wg, xf) + bg.reshape(1, A, 1)   # (N, A, HW)
    att = jnp.einsum("nai,naj->nij", f, g)                        # (N, HW, HW)
    return jax.nn.softmax(att, axis=1)


if __name__ == "__main__":
    key = jax.random.PRNGKey(0)
    k_x, k_wf, k_bf, k_wg, k_bg, k_uf, k_ug = jax.random.split(key, 7)

    N, C, H, W = 2, 4, 16, 16      # batch=2, input_size=4, spatial=16
    A = 8                          # attention_size

    x = jax.random.normal(k_x, (N, C, H, W), dtype=jnp.float32)

    # Conv2d(input_size, attention_size, 1) weights: (A, C, 1, 1) + bias (A,)
    wf_raw = jax.random.normal(k_wf, (A, C, 1, 1), dtype=jnp.float32) * 0.1
    bf = jax.random.normal(k_bf, (A,), dtype=jnp.float32) * 0.1
    wg_raw = jax.random.normal(k_wg, (A, C, 1, 1), dtype=jnp.float32) * 0.1
    bg = jax.random.normal(k_bg, (A,), dtype=jnp.float32) * 0.1

    # SpectralNorm applied to conv weights (deterministic power iteration)
    wf = _spectral_norm(wf_raw, k_uf).reshape(A, C)
    wg = _spectral_norm(wg_raw, k_ug).reshape(A, C)

    out = jax.block_until_ready(self_attention(x, wf, bf, wg, bg))
    ref = jax.block_until_ready(_reference(x, wf, bf, wg, bg))

    assert out.shape == (N, H * W, H * W)
    # approx reciprocal in the softmax epilogue shifts results at the ~1e-3
    # level, so tolerances are loosened vs. the exact-divide version.
    assert jnp.allclose(out, ref, atol=5e-3, rtol=5e-3), "mismatch vs reference"
    # columns of softmax(att, dim=1) sum to 1
    assert jnp.allclose(jnp.sum(out, axis=1), jnp.ones((N, H * W)), atol=5e-3)

    print("KERNEL_OK")
</pallas_src>

<mosaic_0001>
module attributes {stable_mosaic.version = 11 : i64} {
  func.func @_self_attn_kernel(%arg0: i32, %arg1: i32, %arg2: memref<1x4x256xf32, #tpu.memory_space<vmem>>, %arg3: memref<1x4x128xf32, #tpu.memory_space<vmem>>, %arg4: memref<16x4xf32, #tpu.memory_space<vmem>>, %arg5: memref<16x1xf32, #tpu.memory_space<vmem>>, %arg6: memref<1x256x128xf32, #tpu.memory_space<vmem>>) attributes {dimension_semantics = [#tpu.dimension_semantics<parallel>, #tpu.dimension_semantics<parallel>], iteration_bounds = array<i64: 2, 2>, scalar_prefetch = 0 : i64, scratch_operands = 0 : i64, tpu.core_type = #tpu.core_type<tc>, window_params = [{transform_indices = @transform_0, window_bounds = array<i64: 1, 4, 256>}, {transform_indices = @transform_1, window_bounds = array<i64: 1, 4, 128>}, {pipeline_mode = #tpu.pipeline_mode<synchronous>, transform_indices = @transform_2, window_bounds = array<i64: 16, 4>}, {pipeline_mode = #tpu.pipeline_mode<synchronous>, transform_indices = @transform_3, window_bounds = array<i64: 16, 1>}, {transform_indices = @transform_4, window_bounds = array<i64: 1, 256, 128>}]} {
    %c0 = arith.constant 0 : index
    %c0_0 = arith.constant 0 : index
    %c0_1 = arith.constant 0 : index
    %0 = vector.load %arg2[%c0, %c0_0, %c0_1] : memref<1x4x256xf32, #tpu.memory_space<vmem>>, vector<1x4x256xf32>
    %1 = vector.shape_cast %0 : vector<1x4x256xf32> to vector<4x256xf32>
    %c0_2 = arith.constant 0 : index
    %c0_3 = arith.constant 0 : index
    %c0_4 = arith.constant 0 : index
    %2 = vector.load %arg3[%c0_2, %c0_3, %c0_4] : memref<1x4x128xf32, #tpu.memory_space<vmem>>, vector<1x4x128xf32>
    %3 = vector.shape_cast %2 : vector<1x4x128xf32> to vector<4x128xf32>
    %c0_5 = arith.constant 0 : index
    %c0_6 = arith.constant 0 : index
    %4 = vector.load %arg4[%c0_5, %c0_6] : memref<16x4xf32, #tpu.memory_space<vmem>>, vector<16x4xf32>
    %c0_7 = arith.constant 0 : index
    %c0_8 = arith.constant 0 : index
    %5 = vector.load %arg5[%c0_7, %c0_8] : memref<16x1xf32, #tpu.memory_space<vmem>>, vector<16x1xf32>
    %6 = vector.extract_strided_slice %4 {offsets = [0, 0], sizes = [8, 4], strides = [1, 1]} : vector<16x4xf32> to vector<8x4xf32>
    %cst = arith.constant dense<0.000000e+00> : vector<8x256xf32>
    %7 = tpu.matmul %6, %1, %cst {dimension_numbers = #tpu.dot_dimension_numbers<[1], [0], [0], [1], [0, 0, 1, 1], [], []>} : vector<8x4xf32>, vector<4x256xf32>, vector<8x256xf32> -> vector<8x256xf32>
    %8 = vector.extract_strided_slice %5 {offsets = [0, 0], sizes = [8, 1], strides = [1, 1]} : vector<16x1xf32> to vector<8x1xf32>
    %9 = vector.broadcast %8 : vector<8x1xf32> to vector<8x256xf32>
    %10 = arith.addf %7, %9 : vector<8x256xf32>
    %11 = vector.extract_strided_slice %4 {offsets = [8, 0], sizes = [8, 4], strides = [1, 1]} : vector<16x4xf32> to vector<8x4xf32>
    %cst_9 = arith.constant dense<0.000000e+00> : vector<8x128xf32>
    %12 = tpu.matmul %11, %3, %cst_9 {dimension_numbers = #tpu.dot_dimension_numbers<[1], [0], [0], [1], [0, 0, 1, 1], [], []>} : vector<8x4xf32>, vector<4x128xf32>, vector<8x128xf32> -> vector<8x128xf32>
    %13 = vector.extract_strided_slice %5 {offsets = [8, 0], sizes = [8, 1], strides = [1, 1]} : vector<16x1xf32> to vector<8x1xf32>
    %14 = vector.broadcast %13 : vector<8x1xf32> to vector<8x128xf32>
    %15 = arith.addf %12, %14 : vector<8x128xf32>
    %cst_10 = arith.constant dense<0.000000e+00> : vector<256x128xf32>
    %16 = tpu.matmul %10, %15, %cst_10 {dimension_numbers = #tpu.dot_dimension_numbers<[0], [0], [1], [1], [0, 1, 1, 1], [], []>} : vector<8x256xf32>, vector<8x128xf32>, vector<256x128xf32> -> vector<256x128xf32>
    %cst_11 = arith.constant dense<0xFF800000> : vector<128xf32>
    %17 = vector.multi_reduction <maximumf>, %16, %cst_11 [0] : vector<256x128xf32> to vector<128xf32>
    %18 = vector.shape_cast %17 : vector<128xf32> to vector<1x128xf32>
    %19 = vector.broadcast %18 : vector<1x128xf32> to vector<256x128xf32>
    %20 = arith.subf %16, %19 : vector<256x128xf32>
    %21 = math.exp %20 : vector<256x128xf32>
    %cst_12 = arith.constant dense<0.000000e+00> : vector<128xf32>
    %22 = vector.multi_reduction <add>, %21, %cst_12 [0] : vector<256x128xf32> to vector<128xf32>
    %23 = vector.shape_cast %22 : vector<128xf32> to vector<1x128xf32>
    %24 = tpu.reciprocal %23 {approx = true} : vector<1x128xf32> -> vector<1x128xf32>
    %25 = vector.broadcast %24 : vector<1x128xf32> to vector<256x128xf32>
    %26 = arith.mulf %21, %25 : vector<256x128xf32>
    %c0_13 = arith.constant 0 : index
    %c0_14 = arith.constant 0 : index
    %c0_15 = arith.constant 0 : index
    %27 = vector.load %arg6[%c0_13, %c0_14, %c0_15] : memref<1x256x128xf32, #tpu.memory_space<vmem>>, vector<1x256x128xf32>
    %28 = vector.shape_cast %27 : vector<1x256x128xf32> to vector<256x128xf32>
    %29 = vector.shape_cast %26 : vector<256x128xf32> to vector<1x256x128xf32>
    tpu.vector_store %arg6[%c0_13, %c0_14, %c0_15], %29 {strides = array<i32>} : memref<1x256x128xf32, #tpu.memory_space<vmem>>, vector<1x256x128xf32>,
    return
  }
  func.func @transform_0(%arg0: i32, %arg1: i32) -> (i32, i32, i32) {
    %c0_i32 = arith.constant 0 : i32
    %c0_i32_0 = arith.constant 0 : i32
    %c0_i32_1 = arith.constant 0 : i32
    return %arg0, %c0_i32, %c0_i32_0 : i32, i32, i32
  }
  func.func @transform_1(%arg0: i32, %arg1: i32) -> (i32, i32, i32) {
    %c0_i32 = arith.constant 0 : i32
    %c0_i32_0 = arith.constant 0 : i32
    return %arg0, %c0_i32, %arg1 : i32, i32, i32
  }
  func.func @transform_2(%arg0: i32, %arg1: i32) -> (i32, i32) {
    %c0_i32 = arith.constant 0 : i32
    %c0_i32_0 = arith.constant 0 : i32
    %c0_i32_1 = arith.constant 0 : i32
    return %c0_i32, %c0_i32_0 : i32, i32
  }
  func.func @transform_3(%arg0: i32, %arg1: i32) -> (i32, i32) {
    %c0_i32 = arith.constant 0 : i32
    %c0_i32_0 = arith.constant 0 : i32
    %c0_i32_1 = arith.constant 0 : i32
    return %c0_i32, %c0_i32_0 : i32, i32
  }
  func.func @transform_4(%arg0: i32, %arg1: i32) -> (i32, i32, i32) {
    %c0_i32 = arith.constant 0 : i32
    %c0_i32_0 = arith.constant 0 : i32
    return %arg0, %c0_i32, %arg1 : i32, i32, i32
  }
}

</mosaic_0001>

<llo_original>
// kernel: tpu_custom_call.1
$region0: #{tpu_custom_call.1}
  #allocation0 [shape = 'u32[]', space=smem, size = 0x4, offset = 0x4, fixed_abs, tag = 'smem constant byte address 0x4 - core index']
  #allocation1 [shape = 'u32[144,128]{1,0:T(1,128)}', space=vmem, size = 0x12000, scoped, tag = 'internal scratch']
  %s0 = inlined_call_operand.vmem [shape: f32[2,4,256], index: 0, kind: input, shape index: {}]
  %s1 = inlined_call_operand.vmem [shape: f32[2,4,256], index: 1, kind: input, shape index: {}]
  %s2 = inlined_call_operand.vmem [shape: f32[16,4], index: 2, kind: input, shape index: {}]
  %s3 = inlined_call_operand.vmem [shape: f32[16,1], index: 3, kind: input, shape index: {}]
  %s4 = inlined_call_operand.hbm [shape: f32[2,256,256], index: 4, kind: output, shape index: {}]
  %s5 = sld [smem:[#allocation0]]
  $region49: #{tpu_custom_call.1} parent=0
    _
  %s7 = ssub.s32 1, %s5
  %s8 = scalar_select 0, %s7, %s5
  $region1: #{tpu_custom_call.1} parent=0
    #allocation2 [shape = 'u8[262144]{0}', space=vmem, size = 0x40000, scoped, tag = 'output window, operand 0']
    #allocation3 [shape = 's32[2]{0}', space=sflag, size = 0x8, scoped, tag = 'scoped memory for tpu_custom_call.1']
    %9 = vsyncpa [#allocation3], 0
    %s10 = scalar_lea.sflag [#allocation3], 1
    %11 = vsyncpa %s10, 0
    loop: start=0, step=1, limit=6
    $region2: #{tpu_custom_call.1} parent=1 // loop_pre_header
      _
    $region3: #{tpu_custom_call.1} parent=1 // loop_header
      %s13 = sphi 0, %s17
      %p14 = scmp.ge.s32.totalorder %s13, 6
      %s20 = sphi 0, %s32
      %s21 = sphi 0, %s28
      %s22 = sphi 0, %s20
      %s23 = sphi 0, %s21
      %s24 = sphi 0, %s22
      %s25 = sphi 0, %s23
      %s35 = sphi 0, %s37
      %s38 = sphi 0, %s35
      %s39 = sphi 0, %s38
      %s55 = sphi 0, %s39
      %s63 = sphi 0, %s65
      %s66 = sphi 0, %s63
      %s67 = sphi 0, %s66
      %s83 = sphi 0, %s67
      %s87 = sphi 0, %s87
      %s89 = sphi 0, %s87
      %s90 = sphi 0, %s89
      %s104 = sphi 0, %s90
      %s108 = sphi 0, %s108
      %s110 = sphi 0, %s108
      %s111 = sphi 0, %s110
      %s125 = sphi 0, %s111
      %s133 = sphi 0, %s135
      %s136 = sphi 0, %s133
      %s137 = sphi 0, %s136
      %s153 = sphi 0, %s137
    $region4: #{tpu_custom_call.1} parent=1 // loop_header_branch
      %16 = sbr.rel (%p14) target = $region8
    $region5: #{tpu_custom_call.1} parent=1 // loop_body
      %s18 = ssub.s32 %s13, 1
      %s19 = ssub.s32 %s13, 2
      %s26 = sadd.s32 1, %s21
      %p27 = scmp.ge.s32.totalorder %s26, 2
      %s28 = scalar_select %p27, 0, %s26
      %s29 = sadd.s32 1, %s20
      %s30 = scalar_select %p27, %s29, %s20
      %p31 = scmp.ge.s32.totalorder %s30, 2
      %s32 = scalar_select %p31, 0, %s30
      %s33 = ssub.s32 %s20, %s32
      %p34 = scmp.eq.s32.totalorder %s33, 0
      %s36 = sadd.s32 %s35, 1
      %s37 = scalar_select %p34, %s35, %s36
      %p40 = pneg %p34
      %p41 = scmp.eq.s32.totalorder %s13, 3
      %p42 = por %p40, %p41
      %p43 = scmp.ne.s32.totalorder %s35, %s38
      %p44 = scmp.eq.s32.totalorder %s13, 0
      %p45 = por %p43, %p44
      %p46 = scmp.ne.s32.totalorder %s35, %s38
      %p47 = scmp.eq.s32.totalorder %s18, 3
      %p48 = por %p46, %p47
      %p49 = scmp.ne.s32.totalorder %s38, %s39
      %p50 = scmp.eq.s32.totalorder %s18, 0
      %p51 = por %p49, %p50
      %p52 = scmp.ne.s32.totalorder %s38, %s39
      %p53 = scmp.eq.s32.totalorder %s19, 3
      %p54 = por %p52, %p53
      %p56 = scmp.ne.s32.totalorder %s39, %s55
      %p57 = scmp.eq.s32.totalorder %s19, 0
      %p58 = por %p56, %p57
      %s59 = ssub.s32 %s20, %s32
      %s60 = ssub.s32 %s21, %s28
      %s61 = sor.u32 %s59, %s60
      %p62 = scmp.eq.s32.totalorder %s61, 0
      %s64 = sadd.s32 %s63, 1
      %s65 = scalar_select %p62, %s63, %s64
      %p68 = pneg %p62
      %p69 = scmp.eq.s32.totalorder %s13, 3
      %p70 = por %p68, %p69
      %p71 = scmp.ne.s32.totalorder %s63, %s66
      %p72 = scmp.eq.s32.totalorder %s13, 0
      %p73 = por %p71, %p72
      %p74 = scmp.ne.s32.totalorder %s63, %s66
      %p75 = scmp.eq.s32.totalorder %s18, 3
      %p76 = por %p74, %p75
      %p77 = scmp.ne.s32.totalorder %s66, %s67
      %p78 = scmp.eq.s32.totalorder %s18, 0
      %p79 = por %p77, %p78
      %p80 = scmp.ne.s32.totalorder %s66, %s67
      %p81 = scmp.eq.s32.totalorder %s19, 3
      %p82 = por %p80, %p81
      %p84 = scmp.ne.s32.totalorder %s67, %s83
      %p85 = scmp.eq.s32.totalorder %s19, 0
      %p86 = por %p84, %p85
      %s88 = sadd.s32 %s87, 1
      %p91 = scmp.eq.s32.totalorder %s13, 3
      %p92 = scmp.ne.s32.totalorder %s87, %s89
      %p93 = scmp.eq.s32.totalorder %s13, 0
      %p94 = por %p92, %p93
      %p95 = scmp.ne.s32.totalorder %s87, %s89
      %p96 = scmp.eq.s32.totalorder %s18, 3
      %p97 = por %p95, %p96
      %p98 = scmp.ne.s32.totalorder %s89, %s90
      %p99 = scmp.eq.s32.totalorder %s18, 0
      %p100 = por %p98, %p99
      %p101 = scmp.ne.s32.totalorder %s89, %s90
      %p102 = scmp.eq.s32.totalorder %s19, 3
      %p103 = por %p101, %p102
      %p105 = scmp.ne.s32.totalorder %s90, %s104
      %p106 = scmp.eq.s32.totalorder %s19, 0
      %p107 = por %p105, %p106
      %s109 = sadd.s32 %s108, 1
      %p112 = scmp.eq.s32.totalorder %s13, 3
      %p113 = scmp.ne.s32.totalorder %s108, %s110
      %p114 = scmp.eq.s32.totalorder %s13, 0
      %p115 = por %p113, %p114
      %p116 = scmp.ne.s32.totalorder %s108, %s110
      %p117 = scmp.eq.s32.totalorder %s18, 3
      %p118 = por %p116, %p117
      %p119 = scmp.ne.s32.totalorder %s110, %s111
      %p120 = scmp.eq.s32.totalorder %s18, 0
      %p121 = por %p119, %p120
      %p122 = scmp.ne.s32.totalorder %s110, %s111
      %p123 = scmp.eq.s32.totalorder %s19, 3
      %p124 = por %p122, %p123
      %p126 = scmp.ne.s32.totalorder %s111, %s125
      %p127 = scmp.eq.s32.totalorder %s19, 0
      %p128 = por %p126, %p127
      %s129 = ssub.s32 %s20, %s32
      %s130 = ssub.s32 %s21, %s28
      %s131 = sor.u32 %s129, %s130
      %p132 = scmp.eq.s32.totalorder %s131, 0
      %s134 = sadd.s32 %s133, 1
      %s135 = scalar_select %p132, %s133, %s134
      %p138 = pneg %p132
      %p139 = scmp.eq.s32.totalorder %s13, 3
      %p140 = por %p138, %p139
      %p141 = scmp.ne.s32.totalorder %s133, %s136
      %p142 = scmp.eq.s32.totalorder %s13, 0
      %p143 = por %p141, %p142
      %p144 = scmp.ne.s32.totalorder %s133, %s136
      %p145 = scmp.eq.s32.totalorder %s18, 3
      %p146 = por %p144, %p145
      %p147 = scmp.ne.s32.totalorder %s136, %s137
      %p148 = scmp.eq.s32.totalorder %s18, 0
      %p149 = por %p147, %p148
      %p150 = scmp.ne.s32.totalorder %s136, %s137
      %p151 = scmp.eq.s32.totalorder %s19, 3
      %p152 = por %p150, %p151
      %p154 = scmp.ne.s32.totalorder %s137, %s153
      %p155 = scmp.eq.s32.totalorder %s19, 0
      %p156 = por %p154, %p155
      %p157 = scmp.le.s32.totalorder 1, %s13
      %p158 = scmp.lt.s32.totalorder %s13, 5
      %p159 = pnand %p157, %p158
      %p160 = pneg %p159
      // Predicated region
      $region9: #{tpu_custom_call.1} parent=5 // pred_check
        _
      $region10: #{tpu_custom_call.1} parent=5 // pred_check_branch
        %162 = sbr.rel (%p159) target = $region12
      $region11: #{tpu_custom_call.1} parent=5 // pred_region
        %s163 = ssub.s32 %s13, 1
        // Predicated region
        $region13: #{tpu_custom_call.1} parent=11 // pred_check
          %p164 = pneg %p100
        $region14: #{tpu_custom_call.1} parent=11 // pred_check_branch
          %166 = sbr.rel (%p164) target = $region16
        $region15: #{tpu_custom_call.1} parent=11 // pred_region
          _
        $region16: #{tpu_custom_call.1} parent=11 // pred_fallthru
          _
        // Predicated region
        $region17: #{tpu_custom_call.1} parent=11 // pred_check
          %p167 = pneg %p121
        $region18: #{tpu_custom_call.1} parent=11 // pred_check_branch
          %169 = sbr.rel (%p167) target = $region20
        $region19: #{tpu_custom_call.1} parent=11 // pred_region
          _
        $region20: #{tpu_custom_call.1} parent=11 // pred_fallthru
          _
      $region12: #{tpu_custom_call.1} parent=5 // pred_fallthru
        _
      %p170 = scmp.lt.s32.totalorder %s13, 4
      // Predicated region
      $region21: #{tpu_custom_call.1} parent=5 // pred_check
        %p171 = pneg %p170
      $region22: #{tpu_custom_call.1} parent=5 // pred_check_branch
        %173 = sbr.rel (%p171) target = $region24
      $region23: #{tpu_custom_call.1} parent=5 // pred_region
        // Predicated region
        $region25: #{tpu_custom_call.1} parent=23 // pred_check
          %p174 = pneg %p45
        $region26: #{tpu_custom_call.1} parent=23 // pred_check_branch
          %176 = sbr.rel (%p174) target = $region28
        $region27: #{tpu_custom_call.1} parent=23 // pred_region
          %p177 = scmp.lt.s32.totalorder %s20, 1
          %s178 = scalar_select %p177, %s20, 1
          %s179 = smul.addr %s178, 2
          %s180 = smul.addr %s179, 4
          %s181 = scalar_lea.vmem %s0, %s180
        $region28: #{tpu_custom_call.1} parent=23 // pred_fallthru
          _
        // Predicated region
        $region29: #{tpu_custom_call.1} parent=23 // pred_check
          %p182 = pneg %p73
        $region30: #{tpu_custom_call.1} parent=23 // pred_check_branch
          %184 = sbr.rel (%p182) target = $region32
        $region31: #{tpu_custom_call.1} parent=23 // pred_region
          %p185 = scmp.lt.s32.totalorder %s20, 1
          %s186 = scalar_select %p185, %s20, 1
          %p187 = scmp.lt.s32.totalorder %s21, 1
          %s188 = scalar_select %p187, %s21, 1
          %s189 = smul.addr %s186, 2
          %s190 = sadd.s32 %s188, %s189
          %s191 = smul.addr %s190, 4
          %s192 = scalar_lea.vmem %s1, %s191
        $region32: #{tpu_custom_call.1} parent=23 // pred_fallthru
          _
      $region24: #{tpu_custom_call.1} parent=5 // pred_fallthru
        _
      %p193 = scmp.le.s32.totalorder 1, %s13
      %p194 = scmp.lt.s32.totalorder %s13, 5
      %p195 = pnand %p193, %p194
      %p196 = pneg %p195
      // Predicated region
      $region33: #{tpu_custom_call.1} parent=5 // pred_check
        _
      $region34: #{tpu_custom_call.1} parent=5 // pred_check_branch
        %198 = sbr.rel (%p195) target = $region36
      $region35: #{tpu_custom_call.1} parent=5 // pred_region
        %s199 = ssub.s32 %s13, 1
        %p200 = scmp.lt.s32.totalorder %s22, 1
        %s201 = scalar_select %p200, %s22, 1
        %s202 = smul.addr %s201, 2
        %s203 = smul.addr %s202, 4
        %s204 = scalar_lea.vmem %s0, %s203
        %p205 = pneg %p51
        %p206 = pneg %p48
        %p207 = scmp.lt.s32.totalorder %s22, 1
        %s208 = scalar_select %p207, %s22, 1
        %p209 = scmp.lt.s32.totalorder %s23, 1
        %s210 = scalar_select %p209, %s23, 1
        %s211 = smul.addr %s208, 2
        %s212 = sadd.s32 %s210, %s211
        %s213 = smul.addr %s212, 4
        %s214 = scalar_lea.vmem %s1, %s213
        %p215 = pneg %p79
        %p216 = pneg %p76
        %p217 = pneg %p100
        %p218 = pneg %p97
        %p219 = pneg %p121
        %p220 = pneg %p118
        %p221 = pneg %p149
        %p222 = pneg %p146
        %s223 = sand.u32 %s136, 1
        %s224 = scalar_lea.sflag [#allocation3], %s223
        %s225 = sand.u32 %s136, 1
        %s226 = smul.addr %s225, 256
        %s227 = scalar_lea.vmem [#allocation2], %s226
        %p228 = scmp.lt.s32.totalorder %s22, 1
        %s229 = scalar_select %p228, %s22, 1
        %s230 = smul.addr %s229, 2
        %s231 = smul.addr %s230, 4
        %s232 = scalar_lea.vmem %s0, %s231
        %p233 = scmp.lt.s32.totalorder %s22, 1
        %s234 = scalar_select %p233, %s22, 1
        %p235 = scmp.lt.s32.totalorder %s23, 1
        %s236 = scalar_select %p235, %s23, 1
        %s237 = smul.addr %s234, 2
        %s238 = sadd.s32 %s236, %s237
        %s239 = smul.addr %s238, 4
        %s240 = scalar_lea.vmem %s1, %s239
        %v241 = vld [vmem:[%s232] sm:$0xff]
        %v242 = vld [vmem:[%s240] sm:$0xf]
        %v243 = vld [vmem:[%s2] sm:$0xff]
        %v244 = vld [vmem:[%s2 + $0x8] sm:$0xff]
        %v245 = vld [vmem:[%s3] sm:$0xff]
        %v246 = vld [vmem:[%s3 + $0x8] sm:$0xff]
        %248 = vset.pattern.permute.xlu0 0
        %249 = vperm.xlu0 %248, %v245
        %v250 = vpop.permute.xlu0 %249
        %v253 = vcombine.high %v241, %v241
        %vm254 = vcmask 31744
        %v256 = vsel %vm254, %v243, 0
        %vm258 = vcmask 1043456
        %v259 = vsel %vm258, %v241, 0
        %v261 = vsel %vm258, %v253, 0
        %263 = vmatprep.subr.mxu0 %v261
        %264 = vmatpush1.msra.mxu0 %v259
        %265 = vmatprep.subr.mxu0 0.0
        %266 = vmatpush1.msra.mxu0 0.0
        %267 = vmatprep.subr.mxu0 0.0
        %268 = vmatpush1.msra.mxu0 0.0
        %269 = vmatprep.subr.mxu0 0.0
        %270 = vmatpush1.msra.mxu0 0.0
        %271 = vmatprep.subr.mxu0 0.0
        %272 = vmatpush1.msra.mxu0 0.0
        %273 = vmatprep.subr.mxu0 0.0
        %274 = vmatpush1.msra.mxu0 0.0
        %275 = vmatprep.subr.mxu0 0.0
        %276 = vmatpush1.msra.mxu0 0.0
        %277 = vmatprep.subr.mxu0 0.0
        %278 = vmatpush1.msra.mxu0 0.0
        %279 = vmatprep.subr.mxu0 0.0
        %280 = vmatpush1.msra.mxu0 0.0
        %281 = vmatprep.subr.mxu0 0.0
        %282 = vmatpush1.msra.mxu0 0.0
        %283 = vmatprep.subr.mxu0 0.0
        %284 = vmatpush1.msra.mxu0 0.0
        %285 = vmatprep.subr.mxu0 0.0
        %286 = vmatpush1.msra.mxu0 0.0
        %287 = vmatprep.subr.mxu0 0.0
        %288 = vmatpush1.msra.mxu0 0.0
        %289 = vmatprep.subr.mxu0 0.0
        %290 = vmatpush1.msra.mxu0 0.0
        %291 = vmatprep.subr.mxu0 0.0
        %292 = vmatpush1.msra.mxu0 0.0
        %293 = vmatprep.subr.mxu0 0.0
        %294 = vmatpush1.msra.mxu0 0.0
        %295 = vmatprep.subr.mxu0 0.0
        %296 = vmatpush1.msra.mxu0 0.0
        %297 = vmatprep.subr.mxu0 0.0
        %298 = vmatpush1.msra.mxu0 0.0
        %299 = vmatprep.subr.mxu0 0.0
        %300 = vmatpush1.msra.mxu0 0.0
        %301 = vmatprep.subr.mxu0 0.0
        %302 = vmatpush1.msra.mxu0 0.0
        %303 = vmatprep.subr.mxu0 0.0
        %304 = vmatpush1.msra.mxu0 0.0
        %305 = vmatprep.subr.mxu0 0.0
        %306 = vmatpush1.msra.mxu0 0.0
        %307 = vmatprep.subr.mxu0 0.0
        %308 = vmatpush1.msra.mxu0 0.0
        %309 = vmatprep.subr.mxu0 0.0
        %310 = vmatpush1.msra.mxu0 0.0
        %311 = vmatprep.subr.mxu0 0.0
        %312 = vmatpush1.msra.mxu0 0.0
        %313 = vmatprep.subr.mxu0 0.0
        %314 = vmatpush1.msra.mxu0 0.0
        %315 = vmatprep.subr.mxu0 0.0
        %316 = vmatpush1.msra.mxu0 0.0
        %317 = vmatprep.subr.mxu0 0.0
        %318 = vmatpush1.msra.mxu0 0.0
        %319 = vmatprep.subr.mxu0 0.0
        %320 = vmatpush1.msra.mxu0 0.0
        %321 = vmatprep.subr.mxu0 0.0
        %322 = vmatpush1.msra.mxu0 0.0
        %323 = vmatprep.subr.mxu0 0.0
        %324 = vmatpush1.msra.mxu0 0.0
        %325 = vmatprep.subr.mxu0 0.0
        %326 = vmatpush1.msra.mxu0 0.0
        %327 = vmatprep.mubr.f32.mxu0 0.0
        %328 = vmatmul.mubr.f32.gmra.mrb[0].mxu0 %v256
        %v329 = vpop.f32.mrb[0].mxu0
        %v330 = vadd.f32 %v250, %v329
        %v331 = vpop.f32.mrb[0].mxu0
        %v332 = vadd.f32 %v250, %v331
        %333 = vdwg.mxu0
        %335 = vset.pattern.permute.xlu0 0
        %336 = vperm.xlu0 %335, %v246
        %v337 = vpop.permute.xlu0 %336
        %v340 = vsel %vm254, %v244, 0
        %v343 = vsel %vm258, %v242, 0
        %345 = vmatprep.subr.mxu0 0.0
        %346 = vmatpush1.msra.mxu0 %v343
        %347 = vmatprep.subr.mxu0 0.0
        %348 = vmatpush1.msra.mxu0 0.0
        %349 = vmatprep.subr.mxu0 0.0
        %350 = vmatpush1.msra.mxu0 0.0
        %351 = vmatprep.subr.mxu0 0.0
        %352 = vmatpush1.msra.mxu0 0.0
        %353 = vmatprep.subr.mxu0 0.0
        %354 = vmatpush1.msra.mxu0 0.0
        %355 = vmatprep.subr.mxu0 0.0
        %356 = vmatpush1.msra.mxu0 0.0
        %357 = vmatprep.subr.mxu0 0.0
        %358 = vmatpush1.msra.mxu0 0.0
        %359 = vmatprep.subr.mxu0 0.0
        %360 = vmatpush1.msra.mxu0 0.0
        %361 = vmatprep.subr.mxu0 0.0
        %362 = vmatpush1.msra.mxu0 0.0
        %363 = vmatprep.subr.mxu0 0.0
        %364 = vmatpush1.msra.mxu0 0.0
        %365 = vmatprep.subr.mxu0 0.0
        %366 = vmatpush1.msra.mxu0 0.0
        %367 = vmatprep.subr.mxu0 0.0
        %368 = vmatpush1.msra.mxu0 0.0
        %369 = vmatprep.subr.mxu0 0.0
        %370 = vmatpush1.msra.mxu0 0.0
        %371 = vmatprep.subr.mxu0 0.0
        %372 = vmatpush1.msra.mxu0 0.0
        %373 = vmatprep.subr.mxu0 0.0
        %374 = vmatpush1.msra.mxu0 0.0
        %375 = vmatprep.subr.mxu0 0.0
        %376 = vmatpush1.msra.mxu0 0.0
        %377 = vmatprep.subr.mxu0 0.0
        %378 = vmatpush1.msra.mxu0 0.0
        %379 = vmatprep.subr.mxu0 0.0
        %380 = vmatpush1.msra.mxu0 0.0
        %381 = vmatprep.subr.mxu0 0.0
        %382 = vmatpush1.msra.mxu0 0.0
        %383 = vmatprep.subr.mxu0 0.0
        %384 = vmatpush1.msra.mxu0 0.0
        %385 = vmatprep.subr.mxu0 0.0
        %386 = vmatpush1.msra.mxu0 0.0
        %387 = vmatprep.subr.mxu0 0.0
        %388 = vmatpush1.msra.mxu0 0.0
        %389 = vmatprep.subr.mxu0 0.0
        %390 = vmatpush1.msra.mxu0 0.0
        %391 = vmatprep.subr.mxu0 0.0
        %392 = vmatpush1.msra.mxu0 0.0
        %393 = vmatprep.subr.mxu0 0.0
        %394 = vmatpush1.msra.mxu0 0.0
        %395 = vmatprep.subr.mxu0 0.0
        %396 = vmatpush1.msra.mxu0 0.0
        %397 = vmatprep.subr.mxu0 0.0
        %398 = vmatpush1.msra.mxu0 0.0
        %399 = vmatprep.subr.mxu0 0.0
        %400 = vmatpush1.msra.mxu0 0.0
        %401 = vmatprep.subr.mxu0 0.0
        %402 = vmatpush1.msra.mxu0 0.0
        %403 = vmatprep.subr.mxu0 0.0
        %404 = vmatpush1.msra.mxu0 0.0
        %405 = vmatprep.subr.mxu0 0.0
        %406 = vmatpush1.msra.mxu0 0.0
        %407 = vmatprep.subr.mxu0 0.0
        %408 = vmatpush1.msra.mxu0 0.0
        %409 = vmatprep.mubr.f32.mxu0 0.0
        %410 = vmatmul.mubr.f32.gmra.mrb[0].mxu0 %v340
        %v411 = vpop.f32.mrb[0].mxu0
        %v412 = vadd.f32 %v337, %v411
        %v413 = vpop.f32.mrb[0].mxu0
        %414 = vdwg.mxu0
        %415 = vxpose.xlu0.b32.start [1/16] %v330, 128
        %416 = vxpose.xlu0.b32.cont [2/16] 0.0, 128
        %417 = vxpose.xlu0.b32.cont [3/16] 0.0, 128
        %418 = vxpose.xlu0.b32.cont [4/16] 0.0, 128
        %419 = vxpose.xlu0.b32.cont [5/16] 0.0, 128
        %420 = vxpose.xlu0.b32.cont [6/16] 0.0, 128
        %421 = vxpose.xlu0.b32.cont [7/16] 0.0, 128
        %422 = vxpose.xlu0.b32.cont [8/16] 0.0, 128
        %423 = vxpose.xlu0.b32.cont [9/16] 0.0, 128
        %424 = vxpose.xlu0.b32.cont [10/16] 0.0, 128
        %425 = vxpose.xlu0.b32.cont [11/16] 0.0, 128
        %426 = vxpose.xlu0.b32.cont [12/16] 0.0, 128
        %427 = vxpose.xlu0.b32.cont [13/16] 0.0, 128
        %428 = vxpose.xlu0.b32.cont [14/16] 0.0, 128
        %429 = vxpose.xlu0.b32.cont [15/16] 0.0, 128
        %430 = vxpose.xlu0.b32.end [16/16] 0.0, 128
        %v431 = vpop.trf.xlu0
        %v432 = vpop.trf.xlu0
        %v433 = vpop.trf.xlu0
        %v434 = vpop.trf.xlu0
        %v435 = vpop.trf.xlu0
        %v436 = vpop.trf.xlu0
        %v437 = vpop.trf.xlu0
        %v438 = vpop.trf.xlu0
        %v439 = vpop.trf.xlu0
        %v440 = vpop.trf.xlu0
        %v441 = vpop.trf.xlu0
        %v442 = vpop.trf.xlu0
        %v443 = vpop.trf.xlu0
        %v444 = vpop.trf.xlu0
        %v445 = vpop.trf.xlu0
        %v446 = vpop.trf.xlu0
        %447 = vxpose.xlu0.b32.start [1/16] %v332, 128
        %448 = vxpose.xlu0.b32.cont [2/16] 0.0, 128
        %449 = vxpose.xlu0.b32.cont [3/16] 0.0, 128
        %450 = vxpose.xlu0.b32.cont [4/16] 0.0, 128
        %451 = vxpose.xlu0.b32.cont [5/16] 0.0, 128
        %452 = vxpose.xlu0.b32.cont [6/16] 0.0, 128
        %453 = vxpose.xlu0.b32.cont [7/16] 0.0, 128
        %454 = vxpose.xlu0.b32.cont [8/16] 0.0, 128
        %455 = vxpose.xlu0.b32.cont [9/16] 0.0, 128
        %456 = vxpose.xlu0.b32.cont [10/16] 0.0, 128
        %457 = vxpose.xlu0.b32.cont [11/16] 0.0, 128
        %458 = vxpose.xlu0.b32.cont [12/16] 0.0, 128
        %459 = vxpose.xlu0.b32.cont [13/16] 0.0, 128
        %460 = vxpose.xlu0.b32.cont [14/16] 0.0, 128
        %461 = vxpose.xlu0.b32.cont [15/16] 0.0, 128
        %462 = vxpose.xlu0.b32.end [16/16] 0.0, 128
        %v463 = vpop.trf.xlu0
        %v464 = vpop.trf.xlu0
        %v465 = vpop.trf.xlu0
        %v466 = vpop.trf.xlu0
        %v467 = vpop.trf.xlu0
        %v468 = vpop.trf.xlu0
        %v469 = vpop.trf.xlu0
        %v470 = vpop.trf.xlu0
        %v471 = vpop.trf.xlu0
        %v472 = vpop.trf.xlu0
        %v473 = vpop.trf.xlu0
        %v474 = vpop.trf.xlu0
        %v475 = vpop.trf.xlu0
        %v476 = vpop.trf.xlu0
        %v477 = vpop.trf.xlu0
        %v478 = vpop.trf.xlu0
        %vm479 = vcmask 64512
        %v481 = vsel %vm479, %v431, 0
        %v484 = vsel %vm479, %v432, 0
        %v487 = vsel %vm479, %v433, 0
        %v490 = vsel %vm479, %v434, 0
        %v493 = vsel %vm479, %v435, 0
        %v496 = vsel %vm479, %v436, 0
        %v499 = vsel %vm479, %v437, 0
        %v502 = vsel %vm479, %v438, 0
        %v505 = vsel %vm479, %v439, 0
        %v508 = vsel %vm479, %v440, 0
        %v511 = vsel %vm479, %v441, 0
        %v514 = vsel %vm479, %v442, 0
        %v517 = vsel %vm479, %v443, 0
        %v520 = vsel %vm479, %v444, 0
        %v523 = vsel %vm479, %v445, 0
        %v526 = vsel %vm479, %v446, 0
        %v529 = vsel %vm479, %v463, 0
        %v532 = vsel %vm479, %v464, 0
        %v535 = vsel %vm479, %v465, 0
        %v538 = vsel %vm479, %v466, 0
        %v541 = vsel %vm479, %v467, 0
        %v544 = vsel %vm479, %v468, 0
        %v547 = vsel %vm479, %v469, 0
        %v550 = vsel %vm479, %v470, 0
        %v553 = vsel %vm479, %v471, 0
        %v556 = vsel %vm479, %v472, 0
        %v559 = vsel %vm479, %v473, 0
        %v562 = vsel %vm479, %v474, 0
        %v565 = vsel %vm479, %v475, 0
        %v568 = vsel %vm479, %v476, 0
        %v571 = vsel %vm479, %v477, 0
        %v574 = vsel %vm479, %v478, 0
        %576 = vmatprep.subr.mxu0 0.0
        %577 = vmatpush1.msra.mxu0 %v412
        %578 = vmatprep.subr.mxu0 0.0
        %579 = vmatpush1.msra.mxu0 0.0
        %580 = vmatprep.subr.mxu0 0.0
        %581 = vmatpush1.msra.mxu0 0.0
        %582 = vmatprep.subr.mxu0 0.0
        %583 = vmatpush1.msra.mxu0 0.0
        %584 = vmatprep.subr.mxu0 0.0
        %585 = vmatpush1.msra.mxu0 0.0
        %586 = vmatprep.subr.mxu0 0.0
        %587 = vmatpush1.msra.mxu0 0.0
        %588 = vmatprep.subr.mxu0 0.0
        %589 = vmatpush1.msra.mxu0 0.0
        %590 = vmatprep.subr.mxu0 0.0
        %591 = vmatpush1.msra.mxu0 0.0
        %592 = vmatprep.subr.mxu0 0.0
        %593 = vmatpush1.msra.mxu0 0.0
        %594 = vmatprep.subr.mxu0 0.0
        %595 = vmatpush1.msra.mxu0 0.0
        %596 = vmatprep.subr.mxu0 0.0
        %597 = vmatpush1.msra.mxu0 0.0
        %598 = vmatprep.subr.mxu0 0.0
        %599 = vmatpush1.msra.mxu0 0.0
        %600 = vmatprep.subr.mxu0 0.0
        %601 = vmatpush1.msra.mxu0 0.0
        %602 = vmatprep.subr.mxu0 0.0
        %603 = vmatpush1.msra.mxu0 0.0
        %604 = vmatprep.subr.mxu0 0.0
        %605 = vmatpush1.msra.mxu0 0.0
        %606 = vmatprep.subr.mxu0 0.0
        %607 = vmatpush1.msra.mxu0 0.0
        %608 = vmatprep.subr.mxu0 0.0
        %609 = vmatpush1.msra.mxu0 0.0
        %610 = vmatprep.subr.mxu0 0.0
        %611 = vmatpush1.msra.mxu0 0.0
        %612 = vmatprep.subr.mxu0 0.0
        %613 = vmatpush1.msra.mxu0 0.0
        %614 = vmatprep.subr.mxu0 0.0
        %615 = vmatpush1.msra.mxu0 0.0
        %616 = vmatprep.subr.mxu0 0.0
        %617 = vmatpush1.msra.mxu0 0.0
        %618 = vmatprep.subr.mxu0 0.0
        %619 = vmatpush1.msra.mxu0 0.0
        %620 = vmatprep.subr.mxu0 0.0
        %621 = vmatpush1.msra.mxu0 0.0
        %622 = vmatprep.subr.mxu0 0.0
        %623 = vmatpush1.msra.mxu0 0.0
        %624 = vmatprep.subr.mxu0 0.0
        %625 = vmatpush1.msra.mxu0 0.0
        %626 = vmatprep.subr.mxu0 0.0
        %627 = vmatpush1.msra.mxu0 0.0
        %628 = vmatprep.subr.mxu0 0.0
        %629 = vmatpush1.msra.mxu0 0.0
        %630 = vmatprep.subr.mxu0 0.0
        %631 = vmatpush1.msra.mxu0 0.0
        %632 = vmatprep.subr.mxu0 0.0
        %633 = vmatpush1.msra.mxu0 0.0
        %634 = vmatprep.subr.mxu0 0.0
        %635 = vmatpush1.msra.mxu0 0.0
        %636 = vmatprep.subr.mxu0 0.0
        %637 = vmatpush1.msra.mxu0 0.0
        %638 = vmatprep.subr.mxu0 0.0
        %639 = vmatpush1.msra.mxu0 0.0
        %640 = vmatprep.mubr.f32.mxu0 0.0
        %641 = vmatmul.mubr.f32.gmra.mrb[0].mxu0 %v481
        %v642 = vpop.f32.mrb[0].mxu0
        %v643 = vadd.f32 0.0, %v642
        %v644 = vpop.f32.mrb[0].mxu0
        %645 = vmatprep.mubr.f32.mxu0 0.0
        %646 = vmatmul.mubr.f32.gmra.mrb[0].mxu0 %v484
        %v647 = vpop.f32.mrb[0].mxu0
        %v648 = vadd.f32 0.0, %v647
        %v649 = vpop.f32.mrb[0].mxu0
        %650 = vmatprep.mubr.f32.mxu0 0.0
        %651 = vmatmul.mubr.f32.gmra.mrb[0].mxu0 %v487
        %v652 = vpop.f32.mrb[0].mxu0
        %v653 = vadd.f32 0.0, %v652
        %v654 = vpop.f32.mrb[0].mxu0
        %655 = vmatprep.mubr.f32.mxu0 0.0
        %656 = vmatmul.mubr.f32.gmra.mrb[0].mxu0 %v490
        %v657 = vpop.f32.mrb[0].mxu0
        %v658 = vadd.f32 0.0, %v657
        %v659 = vpop.f32.mrb[0].mxu0
        %660 = vmatprep.mubr.f32.mxu0 0.0
        %661 = vmatmul.mubr.f32.gmra.mrb[0].mxu0 %v493
        %v662 = vpop.f32.mrb[0].mxu0
        %v663 = vadd.f32 0.0, %v662
        %v664 = vpop.f32.mrb[0].mxu0
        %665 = vmatprep.mubr.f32.mxu0 0.0
        %666 = vmatmul.mubr.f32.gmra.mrb[0].mxu0 %v496
        %v667 = vpop.f32.mrb[0].mxu0
        %v668 = vadd.f32 0.0, %v667
        %v669 = vpop.f32.mrb[0].mxu0
        %670 = vmatprep.mubr.f32.mxu0 0.0
        %671 = vmatmul.mubr.f32.gmra.mrb[0].mxu0 %v499
        %v672 = vpop.f32.mrb[0].mxu0
        %v673 = vadd.f32 0.0, %v672
        %v674 = vpop.f32.mrb[0].mxu0
        %675 = vmatprep.mubr.f32.mxu0 0.0
        %676 = vmatmul.mubr.f32.gmra.mrb[0].mxu0 %v502
        %v677 = vpop.f32.mrb[0].mxu0
        %v678 = vadd.f32 0.0, %v677
        %v679 = vpop.f32.mrb[0].mxu0
        %680 = vmatprep.mubr.f32.mxu0 0.0
        %681 = vmatmul.mubr.f32.gmra.mrb[0].mxu0 %v505
        %v682 = vpop.f32.mrb[0].mxu0
        %v683 = vadd.f32 0.0, %v682
        %v684 = vpop.f32.mrb[0].mxu0
        %685 = vmatprep.mubr.f32.mxu0 0.0
        %686 = vmatmul.mubr.f32.gmra.mrb[0].mxu0 %v508
        %v687 = vpop.f32.mrb[0].mxu0
        %v688 = vadd.f32 0.0, %v687
        %v689 = vpop.f32.mrb[0].mxu0
        %690 = vmatprep.mubr.f32.mxu0 0.0
        %691 = vmatmul.mubr.f32.gmra.mrb[0].mxu0 %v511
        %v692 = vpop.f32.mrb[0].mxu0
        %v693 = vadd.f32 0.0, %v692
        %v694 = vpop.f32.mrb[0].mxu0
        %695 = vmatprep.mubr.f32.mxu0 0.0
        %696 = vmatmul.mubr.f32.gmra.mrb[0].mxu0 %v514
        %v697 = vpop.f32.mrb[0].mxu0
        %v698 = vadd.f32 0.0, %v697
        %v699 = vpop.f32.mrb[0].mxu0
        %700 = vmatprep.mubr.f32.mxu0 0.0
        %701 = vmatmul.mubr.f32.gmra.mrb[0].mxu0 %v517
        %v702 = vpop.f32.mrb[0].mxu0
        %v703 = vadd.f32 0.0, %v702
        %v704 = vpop.f32.mrb[0].mxu0
        %705 = vmatprep.mubr.f32.mxu0 0.0
        %706 = vmatmul.mubr.f32.gmra.mrb[0].mxu0 %v520
        %v707 = vpop.f32.mrb[0].mxu0
        %v708 = vadd.f32 0.0, %v707
        %v709 = vpop.f32.mrb[0].mxu0
        %710 = vmatprep.mubr.f32.mxu0 0.0
        %711 = vmatmul.mubr.f32.gmra.mrb[0].mxu0 %v523
        %v712 = vpop.f32.mrb[0].mxu0
        %v713 = vadd.f32 0.0, %v712
        %v714 = vpop.f32.mrb[0].mxu0
        %715 = vmatprep.mubr.f32.mxu0 0.0
        %716 = vmatmul.mubr.f32.gmra.mrb[0].mxu0 %v526
        %v717 = vpop.f32.mrb[0].mxu0
        %v718 = vadd.f32 0.0, %v717
        %v719 = vpop.f32.mrb[0].mxu0
        %720 = vmatprep.mubr.f32.mxu0 0.0
        %721 = vmatmul.mubr.f32.gmra.mrb[0].mxu0 %v529
        %v722 = vpop.f32.mrb[0].mxu0
        %v723 = vadd.f32 0.0, %v722
        %v724 = vpop.f32.mrb[0].mxu0
        %725 = vmatprep.mubr.f32.mxu0 0.0
        %726 = vmatmul.mubr.f32.gmra.mrb[0].mxu0 %v532
        %v727 = vpop.f32.mrb[0].mxu0
        %v728 = vadd.f32 0.0, %v727
        %v729 = vpop.f32.mrb[0].mxu0
        %730 = vmatprep.mubr.f32.mxu0 0.0
        %731 = vmatmul.mubr.f32.gmra.mrb[0].mxu0 %v535
        %v732 = vpop.f32.mrb[0].mxu0
        %v733 = vadd.f32 0.0, %v732
        %v734 = vpop.f32.mrb[0].mxu0
        %735 = vmatprep.mubr.f32.mxu0 0.0
        %736 = vmatmul.mubr.f32.gmra.mrb[0].mxu0 %v538
        %v737 = vpop.f32.mrb[0].mxu0
        %v738 = vadd.f32 0.0, %v737
        %v739 = vpop.f32.mrb[0].mxu0
        %740 = vmatprep.mubr.f32.mxu0 0.0
        %741 = vmatmul.mubr.f32.gmra.mrb[0].mxu0 %v541
        %v742 = vpop.f32.mrb[0].mxu0
        %v743 = vadd.f32 0.0, %v742
        %v744 = vpop.f32.mrb[0].mxu0
        %745 = vmatprep.mubr.f32.mxu0 0.0
        %746 = vmatmul.mubr.f32.gmra.mrb[0].mxu0 %v544
        %v747 = vpop.f32.mrb[0].mxu0
        %v748 = vadd.f32 0.0, %v747
        %v749 = vpop.f32.mrb[0].mxu0
        %750 = vmatprep.mubr.f32.mxu0 0.0
        %751 = vmatmul.mubr.f32.gmra.mrb[0].mxu0 %v547
        %v752 = vpop.f32.mrb[0].mxu0
        %v753 = vadd.f32 0.0, %v752
        %v754 = vpop.f32.mrb[0].mxu0
        %755 = vmatprep.mubr.f32.mxu0 0.0
        %756 = vmatmul.mubr.f32.gmra.mrb[0].mxu0 %v550
        %v757 = vpop.f32.mrb[0].mxu0
        %v758 = vadd.f32 0.0, %v757
        %v759 = vpop.f32.mrb[0].mxu0
        %760 = vmatprep.mubr.f32.mxu0 0.0
        %761 = vmatmul.mubr.f32.gmra.mrb[0].mxu0 %v553
        %v762 = vpop.f32.mrb[0].mxu0
        %v763 = vadd.f32 0.0, %v762
        %v764 = vpop.f32.mrb[0].mxu0
        %765 = vmatprep.mubr.f32.mxu0 0.0
        %766 = vmatmul.mubr.f32.gmra.mrb[0].mxu0 %v556
        %v767 = vpop.f32.mrb[0].mxu0
        %v768 = vadd.f32 0.0, %v767
        %v769 = vpop.f32.mrb[0].mxu0
        %770 = vmatprep.mubr.f32.mxu0 0.0
        %771 = vmatmul.mubr.f32.gmra.mrb[0].mxu0 %v559
        %v772 = vpop.f32.mrb[0].mxu0
        %v773 = vadd.f32 0.0, %v772
        %v774 = vpop.f32.mrb[0].mxu0
        %775 = vmatprep.mubr.f32.mxu0 0.0
        %776 = vmatmul.mubr.f32.gmra.mrb[0].mxu0 %v562
        %v777 = vpop.f32.mrb[0].mxu0
        %v778 = vadd.f32 0.0, %v777
        %v779 = vpop.f32.mrb[0].mxu0
        %780 = vmatprep.mubr.f32.mxu0 0.0
        %781 = vmatmul.mubr.f32.gmra.mrb[0].mxu0 %v565
        %v782 = vpop.f32.mrb[0].mxu0
        %v783 = vadd.f32 0.0, %v782
        %v784 = vpop.f32.mrb[0].mxu0
        %785 = vmatprep.mubr.f32.mxu0 0.0
        %786 = vmatmul.mubr.f32.gmra.mrb[0].mxu0 %v568
        %v787 = vpop.f32.mrb[0].mxu0
        %v788 = vadd.f32 0.0, %v787
        %v789 = vpop.f32.mrb[0].mxu0
        %790 = vmatprep.mubr.f32.mxu0 0.0
        %791 = vmatmul.mubr.f32.gmra.mrb[0].mxu0 %v571
        %v792 = vpop.f32.mrb[0].mxu0
        %v793 = vadd.f32 0.0, %v792
        %v794 = vpop.f32.mrb[0].mxu0
        %795 = vmatprep.mubr.f32.mxu0 0.0
        %796 = vmatmul.mubr.f32.gmra.mrb[0].mxu0 %v574
        %v797 = vpop.f32.mrb[0].mxu0
        %v798 = vadd.f32 0.0, %v797
        %v799 = vpop.f32.mrb[0].mxu0
        %800 = vdwg.mxu0
        %v801 = vmax.f32 %v643, %v663
        %v802 = vmax.f32 %v648, %v668
        %v803 = vmax.f32 %v653, %v673
        %v804 = vmax.f32 %v658, %v678
        %v805 = vmax.f32 %v801, %v683
        %v806 = vmax.f32 %v802, %v688
        %v807 = vmax.f32 %v803, %v693
        %v808 = vmax.f32 %v804, %v698
        %v809 = vmax.f32 %v805, %v703
        %v810 = vmax.f32 %v806, %v708
        %v811 = vmax.f32 %v807, %v713
        %v812 = vmax.f32 %v808, %v718
        %v813 = vmax.f32 %v809, %v723
        %v814 = vmax.f32 %v810, %v728
        %v815 = vmax.f32 %v811, %v733
        %v816 = vmax.f32 %v812, %v738
        %v817 = vmax.f32 %v813, %v743
        %v818 = vmax.f32 %v814, %v748
        %v819 = vmax.f32 %v815, %v753
        %v820 = vmax.f32 %v816, %v758
        %v821 = vmax.f32 %v817, %v763
        %v822 = vmax.f32 %v818, %v768
        %v823 = vmax.f32 %v819, %v773
        %v824 = vmax.f32 %v820, %v778
        %v825 = vmax.f32 %v821, %v783
        %v826 = vmax.f32 %v822, %v788
        %v827 = vmax.f32 %v823, %v793
        %v828 = vmax.f32 %v824, %v798
        %v829 = vmax.f32 %v825, %v826
        %v830 = vmax.f32 %v827, %v828
        %v831 = vmax.f32 %v829, %v830
        %v832 = vrot.slane %v831, 4
        %v833 = vmax.f32 %v831, %v832
        %v834 = vrot.slane %v833, 2
        %v835 = vmax.f32 %v833, %v834
        %v836 = vrot.slane %v835, 1
        %v837 = vmax.f32 %v835, %v836
        %v838 = vsub.f32 %v643, %v837
        %v839 = vsub.f32 %v648, %v837
        %v840 = vsub.f32 %v653, %v837
        %v841 = vsub.f32 %v658, %v837
        %v842 = vsub.f32 %v663, %v837
        %v843 = vsub.f32 %v668, %v837
        %v844 = vsub.f32 %v673, %v837
        %v845 = vsub.f32 %v678, %v837
        %v846 = vsub.f32 %v683, %v837
        %v847 = vsub.f32 %v688, %v837
        %v848 = vsub.f32 %v693, %v837
        %v849 = vsub.f32 %v698, %v837
        %v850 = vsub.f32 %v703, %v837
        %v851 = vsub.f32 %v708, %v837
        %v852 = vsub.f32 %v713, %v837
        %v853 = vsub.f32 %v718, %v837
        %v854 = vsub.f32 %v723, %v837
        %v855 = vsub.f32 %v728, %v837
        %v856 = vsub.f32 %v733, %v837
        %v857 = vsub.f32 %v738, %v837
        %v858 = vsub.f32 %v743, %v837
        %v859 = vsub.f32 %v748, %v837
        %v860 = vsub.f32 %v753, %v837
        %v861 = vsub.f32 %v758, %v837
        %v862 = vsub.f32 %v763, %v837
        %v863 = vsub.f32 %v768, %v837
        %v864 = vsub.f32 %v773, %v837
        %v865 = vsub.f32 %v778, %v837
        %v866 = vsub.f32 %v783, %v837
        %v867 = vsub.f32 %v788, %v837
        %v868 = vsub.f32 %v793, %v837
        %v869 = vsub.f32 %v798, %v837
        %v870 = vmul.f32 %v838, 1.442695
        %v871 = vpow.pop %v870
        %v872 = vmul.f32 %v839, 1.442695
        %v873 = vpow.pop %v872
        %v874 = vmul.f32 %v840, 1.442695
        %v875 = vpow.pop %v874
        %v876 = vmul.f32 %v841, 1.442695
        %v877 = vpow.pop %v876
        %v878 = vmul.f32 %v842, 1.442695
        %v879 = vpow.pop %v878
        %v880 = vmul.f32 %v843, 1.442695
        %v881 = vpow.pop %v880
        %v882 = vmul.f32 %v844, 1.442695
        %v883 = vpow.pop %v882
        %v884 = vmul.f32 %v845, 1.442695
        %v885 = vpow.pop %v884
        %v886 = vmul.f32 %v846, 1.442695
        %v887 = vpow.pop %v886
        %v888 = vmul.f32 %v847, 1.442695
        %v889 = vpow.pop %v888
        %v890 = vmul.f32 %v848, 1.442695
        %v891 = vpow.pop %v890
        %v892 = vmul.f32 %v849, 1.442695
        %v893 = vpow.pop %v892
        %v894 = vmul.f32 %v850, 1.442695
        %v895 = vpow.pop %v894
        %v896 = vmul.f32 %v851, 1.442695
        %v897 = vpow.pop %v896
        %v898 = vmul.f32 %v852, 1.442695
        %v899 = vpow.pop %v898
        %v900 = vmul.f32 %v853, 1.442695
        %v901 = vpow.pop %v900
        %v902 = vmul.f32 %v854, 1.442695
        %v903 = vpow.pop %v902
        %v904 = vmul.f32 %v855, 1.442695
        %v905 = vpow.pop %v904
        %v906 = vmul.f32 %v856, 1.442695
        %v907 = vpow.pop %v906
        %v908 = vmul.f32 %v857, 1.442695
        %v909 = vpow.pop %v908
        %v910 = vmul.f32 %v858, 1.442695
        %v911 = vpow.pop %v910
        %v912 = vmul.f32 %v859, 1.442695
        %v913 = vpow.pop %v912
        %v914 = vmul.f32 %v860, 1.442695
        %v915 = vpow.pop %v914
        %v916 = vmul.f32 %v861, 1.442695
        %v917 = vpow.pop %v916
        %v918 = vmul.f32 %v862, 1.442695
        %v919 = vpow.pop %v918
        %v920 = vmul.f32 %v863, 1.442695
        %v921 = vpow.pop %v920
        %v922 = vmul.f32 %v864, 1.442695
        %v923 = vpow.pop %v922
        %v924 = vmul.f32 %v865, 1.442695
        %v925 = vpow.pop %v924
        %v926 = vmul.f32 %v866, 1.442695
        %v927 = vpow.pop %v926
        %v928 = vmul.f32 %v867, 1.442695
        %v929 = vpow.pop %v928
        %v930 = vmul.f32 %v868, 1.442695
        %v931 = vpow.pop %v930
        %v932 = vmul.f32 %v869, 1.442695
        %v933 = vpow.pop %v932
        %v934 = vadd.f32 %v871, %v873
        %v935 = vadd.f32 %v934, %v875
        %v936 = vadd.f32 %v935, %v877
        %v937 = vadd.f32 %v936, %v879
        %v938 = vadd.f32 %v937, %v881
        %v939 = vadd.f32 %v938, %v883
        %v940 = vadd.f32 %v939, %v885
        %v941 = vadd.f32 %v940, %v887
        %v942 = vadd.f32 %v941, %v889
        %v943 = vadd.f32 %v942, %v891
        %v944 = vadd.f32 %v943, %v893
        %v945 = vadd.f32 %v944, %v895
        %v946 = vadd.f32 %v945, %v897
        %v947 = vadd.f32 %v946, %v899
        %v948 = vadd.f32 %v947, %v901
        %v949 = vadd.f32 %v948, %v903
        %v950 = vadd.f32 %v949, %v905
        %v951 = vadd.f32 %v950, %v907
        %v952 = vadd.f32 %v951, %v909
        %v953 = vadd.f32 %v952, %v911
        %v954 = vadd.f32 %v953, %v913
        %v955 = vadd.f32 %v954, %v915
        %v956 = vadd.f32 %v955, %v917
        %v957 = vadd.f32 %v956, %v919
        %v958 = vadd.f32 %v957, %v921
        %v959 = vadd.f32 %v958, %v923
        %v960 = vadd.f32 %v959, %v925
        %v961 = vadd.f32 %v960, %v927
        %v962 = vadd.f32 %v961, %v929
        %v963 = vadd.f32 %v962, %v931
        %v964 = vadd.f32 %v963, %v933
        %v965 = vrot.slane %v964, 4
        %v966 = vadd.f32 %v964, %v965
        %v967 = vrot.slane %v966, 2
        %v968 = vadd.f32 %v966, %v967
        %v969 = vrot.slane %v968, 1
        %v970 = vadd.f32 %v968, %v969
        %v971 = vrcp.pop %v970
        %v972 = vmul.f32 %v871, %v971
        %v973 = vmul.f32 %v873, %v971
        %v974 = vmul.f32 %v875, %v971
        %v975 = vmul.f32 %v877, %v971
        %v976 = vmul.f32 %v879, %v971
        %v977 = vmul.f32 %v881, %v971
        %v978 = vmul.f32 %v883, %v971
        %v979 = vmul.f32 %v885, %v971
        %v980 = vmul.f32 %v887, %v971
        %v981 = vmul.f32 %v889, %v971
        %v982 = vmul.f32 %v891, %v971
        %v983 = vmul.f32 %v893, %v971
        %v984 = vmul.f32 %v895, %v971
        %v985 = vmul.f32 %v897, %v971
        %v986 = vmul.f32 %v899, %v971
        %v987 = vmul.f32 %v901, %v971
        %v988 = vmul.f32 %v903, %v971
        %v989 = vmul.f32 %v905, %v971
        %v990 = vmul.f32 %v907, %v971
        %v991 = vmul.f32 %v909, %v971
        %v992 = vmul.f32 %v911, %v971
        %v993 = vmul.f32 %v913, %v971
        %v994 = vmul.f32 %v915, %v971
        %v995 = vmul.f32 %v917, %v971
        %v996 = vmul.f32 %v919, %v971
        %v997 = vmul.f32 %v921, %v971
        %v998 = vmul.f32 %v923, %v971
        %v999 = vmul.f32 %v925, %v971
        %v1000 = vmul.f32 %v927, %v971
        %v1001 = vmul.f32 %v929, %v971
        %v1002 = vmul.f32 %v931, %v971
        %v1003 = vmul.f32 %v933, %v971
        %1004 = vst [vmem:[%s227] sm:$0xff] %v972
        %1005 = vst [vmem:[%s227 + $0x8] sm:$0xff] %v973
        %1006 = vst [vmem:[%s227 + $0x10] sm:$0xff] %v974
        %1007 = vst [vmem:[%s227 + $0x18] sm:$0xff] %v975
        %1008 = vst [vmem:[%s227 + $0x20] sm:$0xff] %v976
        %1009 = vst [vmem:[%s227 + $0x28] sm:$0xff] %v977
        %1010 = vst [vmem:[%s227 + $0x30] sm:$0xff] %v978
        %1011 = vst [vmem:[%s227 + $0x38] sm:$0xff] %v979
        %1012 = vst [vmem:[%s227 + $0x40] sm:$0xff] %v980
        %1013 = vst [vmem:[%s227 + $0x48] sm:$0xff] %v981
        %1014 = vst [vmem:[%s227 + $0x50] sm:$0xff] %v982
        %1015 = vst [vmem:[%s227 + $0x58] sm:$0xff] %v983
        %1016 = vst [vmem:[%s227 + $0x60] sm:$0xff] %v984
        %1017 = vst [vmem:[%s227 + $0x68] sm:$0xff] %v985
        %1018 = vst [vmem:[%s227 + $0x70] sm:$0xff] %v986
        %1019 = vst [vmem:[%s227 + $0x78] sm:$0xff] %v987
        %1020 = vst [vmem:[%s227 + $0x80] sm:$0xff] %v988
        %1021 = vst [vmem:[%s227 + $0x88] sm:$0xff] %v989
        %1022 = vst [vmem:[%s227 + $0x90] sm:$0xff] %v990
        %1023 = vst [vmem:[%s227 + $0x98] sm:$0xff] %v991
        %1024 = vst [vmem:[%s227 + $0xa0] sm:$0xff] %v992
        %1025 = vst [vmem:[%s227 + $0xa8] sm:$0xff] %v993
        %1026 = vst [vmem:[%s227 + $0xb0] sm:$0xff] %v994
        %1027 = vst [vmem:[%s227 + $0xb8] sm:$0xff] %v995
        %1028 = vst [vmem:[%s227 + $0xc0] sm:$0xff] %v996
        %1029 = vst [vmem:[%s227 + $0xc8] sm:$0xff] %v997
        %1030 = vst [vmem:[%s227 + $0xd0] sm:$0xff] %v998
        %1031 = vst [vmem:[%s227 + $0xd8] sm:$0xff] %v999
        %1032 = vst [vmem:[%s227 + $0xe0] sm:$0xff] %v1000
        %1033 = vst [vmem:[%s227 + $0xe8] sm:$0xff] %v1001
        %1034 = vst [vmem:[%s227 + $0xf0] sm:$0xff] %v1002
        %1035 = vst [vmem:[%s227 + $0xf8] sm:$0xff] %v1003
        %s1036 = sand.u32 %s136, 1
        %s1037 = scalar_lea.sflag [#allocation3], %s1036
        %s1038 = sand.u32 %s136, 1
        %s1039 = smul.addr %s1038, 256
        %s1040 = scalar_lea.vmem [#allocation2], %s1039
        // Predicated region
        $region37: #{tpu_custom_call.1} parent=35 // pred_check
          %p1041 = pneg %p146
        $region38: #{tpu_custom_call.1} parent=35 // pred_check_branch
          %1043 = sbr.rel (%p1041) target = $region40
        $region39: #{tpu_custom_call.1} parent=35 // pred_region
          %s1045 = ssub.s32 4096, 4096
          %1046 = vsyncadd %s1037, %s1045
          %s1047 = smul.addr %s22, 64
          %s1048 = sadd.s32 %s23, %s1047
          %s1049 = smul.addr %s1048, 128
          %s1050 = scalar_lea.hbm %s4, %s1049
          %s1051 = sshll.u32 %s1040, 4
          %s1052 = int_to_ptr.vmem [resolvable:$true] %s1051
          %1057 = dma.vmem_to_hbm [thread:$0]  %s1052, 4096, %s1050, %s1037, 128, 256, 8
        $region40: #{tpu_custom_call.1} parent=35 // pred_fallthru
          _
      $region36: #{tpu_custom_call.1} parent=5 // pred_fallthru
        _
      %p1058 = scmp.le.s32.totalorder 2, %s13
      // Predicated region
      $region41: #{tpu_custom_call.1} parent=5 // pred_check
        %p1059 = pneg %p1058
      $region42: #{tpu_custom_call.1} parent=5 // pred_check_branch
        %1061 = sbr.rel (%p1059) target = $region44
      $region43: #{tpu_custom_call.1} parent=5 // pred_region
        %s1062 = ssub.s32 %s13, 2
        // Predicated region
        $region45: #{tpu_custom_call.1} parent=43 // pred_check
          %p1063 = pneg %p152
        $region46: #{tpu_custom_call.1} parent=43 // pred_check_branch
          %1065 = sbr.rel (%p1063) target = $region48
        $region47: #{tpu_custom_call.1} parent=43 // pred_region
          %s1066 = sand.u32 %s137, 1
          %s1067 = scalar_lea.sflag [#allocation3], %s1066
          %s1068 = sand.u32 %s137, 1
          %s1069 = smul.addr %s1068, 256
          %s1070 = scalar_lea.vmem [#allocation2], %s1069
          %1071 = dma.done %s1067, 4096
        $region48: #{tpu_custom_call.1} parent=43 // pred_fallthru
          _
      $region44: #{tpu_custom_call.1} parent=5 // pred_fallthru
        _
    $region6: #{tpu_custom_call.1} parent=1 // loop_footer
      %s17 = sadd.s32 1, %s13
    $region7: #{tpu_custom_call.1} parent=1 // loop_footer_branch
      %12 = sbr.rel target = $region3
    $region8: #{tpu_custom_call.1} parent=1 // loop_exit
      _
    %1072 = vsyncpa [#allocation3], 1
    %s1073 = scalar_lea.sflag [#allocation3], 1
    %1074 = vsyncpa %s1073, 1

</llo_original>
